<compile_context>
chip_gen: v6e
topology: v6e:2x2x1
jax: 0.10.0
libtpu: 0.0.40
codegen_flags: <defaults>
</compile_context>

<pallas_src>
import functools

import jax
import jax.numpy as jnp
from jax import lax
from jax.experimental import pallas as pl
from jax.experimental.pallas import tpu as pltpu


def _sublane_multiple(itemsize: int) -> int:
    return 8 if itemsize >= 4 else (16 if itemsize == 2 else 32)


def _round_up(v: int, m: int) -> int:
    return ((v + m - 1) // m) * m


def _freq_expert_kernel(x_ref, w_ref, b_ref, o_ref, acc_ref, *,
                        inv_n, n_valid, fold, d_out, matmul_dtype):
    # x_ref:   (TB, TN, D_in)  streamed (folded-)token chunk, source dtype
    # w_ref:   (D, D)          W^T (already transposed in wrapper), resident
    # b_ref:   (1, D)          bias, resident
    # o_ref:   (TB, D)         output tile (written only on last token chunk)
    # acc_ref: (TB, D_in)      f32 running token-sum accumulator (VMEM scratch)
    n = pl.program_id(1)
    last = pl.num_programs(1) - 1
    tn = x_ref.shape[1]

    @pl.when(n == 0)
    def _init():
        acc_ref[...] = jnp.zeros_like(acc_ref)

    def _accumulate(mask_tail):
        x = x_ref[...]
        if mask_tail:
            # Ragged last chunk: zero out tokens past the real token count so
            # unspecified OOB data never reaches the accumulator.
            ids = n * tn + lax.broadcasted_iota(jnp.int32, x.shape, 1)
            x = jnp.where(ids < n_valid, x, jnp.zeros_like(x))
        acc_ref[...] += jnp.sum(x, axis=1, dtype=jnp.float32)

    if n_valid % tn != 0:           # static: a ragged tail chunk exists
        @pl.when(n == last)
        def _tail():
            _accumulate(True)

        @pl.when(n != last)
        def _body():
            _accumulate(False)
    else:
        _accumulate(False)

    @pl.when(n == last)
    def _finalize():
        acc = acc_ref[...]                                   # (TB, D_in) f32
        if fold > 1:
            # Undo the lane folding: D_in = fold * d_out; sum the fold groups.
            s = acc[:, 0:d_out]
            for g in range(1, fold):
                s = s + acc[:, g * d_out:(g + 1) * d_out]
            acc = s                                          # (TB, D) f32
        pooled = (acc * inv_n).astype(matmul_dtype)
        w = w_ref[...]
        if w.dtype != matmul_dtype:
            w = w.astype(matmul_dtype)
        out = jnp.dot(pooled, w, preferred_element_type=jnp.float32)
        out = out + b_ref[...].astype(jnp.float32)
        o_ref[...] = out.astype(o_ref.dtype)


def simple_frequency_expert(vit_tokens: jax.Array,
                            weight: jax.Array,
                            bias: jax.Array) -> jax.Array:
    """vit_tokens: (B, N, D); weight: (D_out, D_in) PyTorch layout; bias: (D_out,)."""
    B, N, D = vit_tokens.shape
    x_item = jnp.dtype(vit_tokens.dtype).itemsize
    w_item = jnp.dtype(weight.dtype).itemsize
    b_item = jnp.dtype(bias.dtype).itemsize
    sub_x = _sublane_multiple(x_item)

    # ---- small-D lane folding: make every load/store 128-lane dense --------
    fold, d_in, n_in, x_in = 1, D, N, vit_tokens
    if D < 128 and 128 % D == 0 and (N * D) % 128 == 0:
        fold = 128 // D
        d_in = 128
        n_in = (N * D) // 128
        x_in = vit_tokens.reshape(B, n_in, 128)   # contiguous: free reshape

    # ---- generation-aware VMEM budgets --------------------------------------
    try:
        info = pltpu.get_tpu_info()
        vmem_phys = int(getattr(info, "vmem_capacity_bytes", 0) or 0)
    except Exception:
        vmem_phys = 0
    if vmem_phys <= 0:
        vmem_phys = 64 * 1024 * 1024              # conservative (v7x-like)
    # ~8 MiB per pipeline buffer on v7x (64 MiB VMEM), ~16 MiB on v5e/v6e.
    per_buf_budget = max(2 * 1024 * 1024, min(16 * 1024 * 1024, vmem_phys // 8))
    vmem_cap = (vmem_phys * 3) // 4               # leave headroom for Mosaic

    # ---- batch tile: >= 2 programs on the "parallel" axis when B allows -----
    if B >= 2 * sub_x:
        tb = min(128, _round_up(pl.cdiv(B, 2), sub_x))
    else:
        tb = B

    # Guard for huge D: shrink tb before flooring tn would blow the budget.
    while tb > sub_x and tb * sub_x * d_in * x_item > per_buf_budget:
        tb = max(sub_x, ((tb // 2) // sub_x) * sub_x)

    # ---- token chunk: fill the per-buffer budget, snap to sublane multiple --
    per_token_bytes = max(1, tb * d_in * x_item)
    tn = per_buf_budget // per_token_bytes
    tn = max(sub_x, (tn // sub_x) * sub_x)
    if tn >= n_in:
        tn = n_in                                 # full extent: no ragged tail

    grid = (pl.cdiv(B, tb), pl.cdiv(n_in, tn))

    # ---- VMEM usage estimate + scoped limit ---------------------------------
    est = (2 * tb * tn * d_in * x_item            # double-buffered token stream
           + 2 * D * D * w_item                   # weight (<=2 buffers)
           + 2 * D * b_item
           + 2 * tb * D * x_item                  # output tile buffers
           + tb * d_in * 4)                       # f32 accumulator scratch
    vmem_limit = int(min(vmem_cap, max(2 * est, 32 * 1024 * 1024)))

    cost = pl.CostEstimate(
        flops=B * N * D + 2 * B * D * D,
        transcendentals=0,
        bytes_accessed=(B * N * D * x_item + D * D * w_item
                        + D * b_item + B * D * x_item))

    matmul_dtype = jnp.promote_types(vit_tokens.dtype, weight.dtype)
    kernel = functools.partial(
        _freq_expert_kernel, inv_n=1.0 / N, n_valid=n_in, fold=fold,
        d_out=D, matmul_dtype=matmul_dtype)

    w_t = weight.T                                # one-time (D_in, D_out) copy
    b2d = bias.reshape(1, D)

    def _run(single_buffer_resident: bool):
        if single_buffer_resident:
            # Constant index_map -> never re-DMA'd; one buffer is enough.
            w_spec = pl.BlockSpec((D, D), lambda b, n: (0, 0),
                                  pipeline_mode=pl.Buffered(1))
            b_spec = pl.BlockSpec((1, D), lambda b, n: (0, 0),
                                  pipeline_mode=pl.Buffered(1))
        else:
            w_spec = pl.BlockSpec((D, D), lambda b, n: (0, 0))
            b_spec = pl.BlockSpec((1, D), lambda b, n: (0, 0))
        return pl.pallas_call(
            kernel,
            out_shape=jax.ShapeDtypeStruct((B, D), vit_tokens.dtype),
            grid_spec=pltpu.PrefetchScalarGridSpec(
                num_scalar_prefetch=0,
                grid=grid,
                in_specs=[
                    pl.BlockSpec((tb, tn, d_in), lambda b, n: (b, n, 0)),
                    w_spec,
                    b_spec,
                ],
                out_specs=pl.BlockSpec((tb, D), lambda b, n: (b, 0)),
                scratch_shapes=[pltpu.VMEM((tb, d_in), jnp.float32)],
            ),
            compiler_params=pltpu.CompilerParams(
                dimension_semantics=("parallel", "arbitrary"),
                vmem_limit_bytes=vmem_limit),
            cost_estimate=cost,
        )(x_in, w_t, b2d)

    try:
        return _run(True)
    except Exception:
        # pipeline_mode / Buffered(1) unsupported in this JAX build -> default
        # double-buffered resident operands (correctness unaffected).
        return _run(False)


if __name__ == "__main__":
    # Small shapes consistent with the module interface.
    B, N, D = 2, 8, 32   # batch, tokens, embed_dim

    key = jax.random.PRNGKey(0)
    k_x, k_w, k_b = jax.random.split(key, 3)

    vit_tokens = jax.random.normal(k_x, (B, N, D), dtype=jnp.float32)
    # "nn.Linear(embed_dim, embed_dim)" parameters (PyTorch layout: (out, in)).
    weight = jax.random.normal(k_w, (D, D), dtype=jnp.float32) * 0.02
    bias = jax.random.normal(k_b, (D,), dtype=jnp.float32) * 0.01

    out = simple_frequency_expert(vit_tokens, weight, bias)
    out = jax.block_until_ready(out)

    # Pure-JAX reference (mean over token dim, then x @ W.T + b).
    ref = jnp.mean(vit_tokens, axis=1) @ weight.T + bias
    assert out.shape == (B, D)
    assert jnp.allclose(out, ref, atol=1e-5, rtol=1e-5), "mismatch vs reference"

    print("KERNEL_OK")
</pallas_src>

<mosaic_0001>
module attributes {stable_mosaic.version = 11 : i64} {
  func.func @_freq_expert_kernel(%arg0: i32, %arg1: i32, %arg2: memref<2x2x128xf32, #tpu.memory_space<vmem>>, %arg3: memref<32x32xf32, #tpu.memory_space<vmem>>, %arg4: memref<1x32xf32, #tpu.memory_space<vmem>>, %arg5: memref<2x32xf32, #tpu.memory_space<vmem>>, %arg6: memref<2x128xf32, #tpu.memory_space<vmem>>) attributes {dimension_semantics = [#tpu.dimension_semantics<parallel>, #tpu.dimension_semantics<arbitrary>], iteration_bounds = array<i64: 1, 1>, scalar_prefetch = 0 : i64, scratch_operands = 1 : i64, tpu.core_type = #tpu.core_type<tc>, window_params = [{transform_indices = @transform_0, window_bounds = array<i64: 2, 2, 128>}, {pipeline_mode = #tpu.pipeline_mode<synchronous>, transform_indices = @transform_1, window_bounds = array<i64: 32, 32>}, {pipeline_mode = #tpu.pipeline_mode<synchronous>, transform_indices = @transform_2, window_bounds = array<i64: 1, 32>}, {transform_indices = @transform_3, window_bounds = array<i64: 2, 32>}]} {
    %c0_i32 = arith.constant 0 : i32
    %0 = arith.cmpi eq, %arg1, %c0_i32 : i32
    %1 = arith.extui %0 : i1 to i32
    %c0_i32_0 = arith.constant 0 : i32
    %2 = arith.cmpi ne, %1, %c0_i32_0 : i32
    scf.if %2 {
      %cst_9 = arith.constant 0.000000e+00 : f32
      %11 = vector.broadcast %cst_9 : f32 to vector<2x128xf32>
      %c0_10 = arith.constant 0 : index
      %c0_11 = arith.constant 0 : index
      %12 = vector.load %arg6[%c0_10, %c0_11] : memref<2x128xf32, #tpu.memory_space<vmem>>, vector<2x128xf32>
      tpu.vector_store %arg6[%c0_10, %c0_11], %11 {strides = array<i32>} : memref<2x128xf32, #tpu.memory_space<vmem>>, vector<2x128xf32>,
    } else {
    }
    %c0 = arith.constant 0 : index
    %c0_1 = arith.constant 0 : index
    %c0_2 = arith.constant 0 : index
    %3 = vector.load %arg2[%c0, %c0_1, %c0_2] : memref<2x2x128xf32, #tpu.memory_space<vmem>>, vector<2x2x128xf32>
    %c0_3 = arith.constant 0 : index
    %c0_4 = arith.constant 0 : index
    %4 = vector.load %arg6[%c0_3, %c0_4] : memref<2x128xf32, #tpu.memory_space<vmem>>, vector<2x128xf32>
    %cst = arith.constant dense<0.000000e+00> : vector<2x128xf32>
    %5 = vector.multi_reduction <add>, %3, %cst [1] : vector<2x2x128xf32> to vector<2x128xf32>
    %6 = arith.addf %4, %5 : vector<2x128xf32>
    %c0_5 = arith.constant 0 : index
    %c0_6 = arith.constant 0 : index
    %7 = vector.load %arg6[%c0_5, %c0_6] : memref<2x128xf32, #tpu.memory_space<vmem>>, vector<2x128xf32>
    tpu.vector_store %arg6[%c0_5, %c0_6], %6 {strides = array<i32>} : memref<2x128xf32, #tpu.memory_space<vmem>>, vector<2x128xf32>,
    %c0_i32_7 = arith.constant 0 : i32
    %8 = arith.cmpi eq, %arg1, %c0_i32_7 : i32
    %9 = arith.extui %8 : i1 to i32
    %c0_i32_8 = arith.constant 0 : i32
    %10 = arith.cmpi ne, %9, %c0_i32_8 : i32
    scf.if %10 {
      %c0_9 = arith.constant 0 : index
      %c0_10 = arith.constant 0 : index
      %11 = vector.load %arg6[%c0_9, %c0_10] : memref<2x128xf32, #tpu.memory_space<vmem>>, vector<2x128xf32>
      %12 = vector.extract_strided_slice %11 {offsets = [0, 0], sizes = [2, 32], strides = [1, 1]} : vector<2x128xf32> to vector<2x32xf32>
      %13 = vector.extract_strided_slice %11 {offsets = [0, 32], sizes = [2, 32], strides = [1, 1]} : vector<2x128xf32> to vector<2x32xf32>
      %14 = arith.addf %12, %13 : vector<2x32xf32>
      %15 = vector.extract_strided_slice %11 {offsets = [0, 64], sizes = [2, 32], strides = [1, 1]} : vector<2x128xf32> to vector<2x32xf32>
      %16 = arith.addf %14, %15 : vector<2x32xf32>
      %17 = vector.extract_strided_slice %11 {offsets = [0, 96], sizes = [2, 32], strides = [1, 1]} : vector<2x128xf32> to vector<2x32xf32>
      %18 = arith.addf %16, %17 : vector<2x32xf32>
      %cst_11 = arith.constant 1.250000e-01 : f32
      %19 = vector.broadcast %cst_11 : f32 to vector<2x32xf32>
      %20 = arith.mulf %18, %19 : vector<2x32xf32>
      %c0_12 = arith.constant 0 : index
      %c0_13 = arith.constant 0 : index
      %21 = vector.load %arg3[%c0_12, %c0_13] : memref<32x32xf32, #tpu.memory_space<vmem>>, vector<32x32xf32>
      %cst_14 = arith.constant dense<0.000000e+00> : vector<2x32xf32>
      %22 = tpu.matmul %20, %21, %cst_14 {dimension_numbers = #tpu.dot_dimension_numbers<[1], [0], [0], [1], [0, 0, 1, 1], [], []>} : vector<2x32xf32>, vector<32x32xf32>, vector<2x32xf32> -> vector<2x32xf32>
      %c0_15 = arith.constant 0 : index
      %c0_16 = arith.constant 0 : index
      %23 = vector.load %arg4[%c0_15, %c0_16] : memref<1x32xf32, #tpu.memory_space<vmem>>, vector<1x32xf32>
      %24 = vector.broadcast %23 : vector<1x32xf32> to vector<2x32xf32>
      %25 = arith.addf %22, %24 : vector<2x32xf32>
      %c0_17 = arith.constant 0 : index
      %c0_18 = arith.constant 0 : index
      %26 = vector.load %arg5[%c0_17, %c0_18] : memref<2x32xf32, #tpu.memory_space<vmem>>, vector<2x32xf32>
      tpu.vector_store %arg5[%c0_17, %c0_18], %25 {strides = array<i32>} : memref<2x32xf32, #tpu.memory_space<vmem>>, vector<2x32xf32>,
    } else {
    }
    return
  }
  func.func @transform_0(%arg0: i32, %arg1: i32) -> (i32, i32, i32) {
    %c0_i32 = arith.constant 0 : i32
    %c0_i32_0 = arith.constant 0 : i32
    return %arg0, %arg1, %c0_i32 : i32, i32, i32
  }
  func.func @transform_1(%arg0: i32, %arg1: i32) -> (i32, i32) {
    %c0_i32 = arith.constant 0 : i32
    %c0_i32_0 = arith.constant 0 : i32
    %c0_i32_1 = arith.constant 0 : i32
    return %c0_i32, %c0_i32_0 : i32, i32
  }
  func.func @transform_2(%arg0: i32, %arg1: i32) -> (i32, i32) {
    %c0_i32 = arith.constant 0 : i32
    %c0_i32_0 = arith.constant 0 : i32
    %c0_i32_1 = arith.constant 0 : i32
    return %c0_i32, %c0_i32_0 : i32, i32
  }
  func.func @transform_3(%arg0: i32, %arg1: i32) -> (i32, i32) {
    %c0_i32 = arith.constant 0 : i32
    %c0_i32_0 = arith.constant 0 : i32
    return %arg0, %c0_i32 : i32, i32
  }
}

module attributes {stable_mosaic.version = 11 : i64} {
  func.func @_freq_expert_kernel(%arg0: i32, %arg1: i32, %arg2: memref<2x2x128xf32, #tpu.memory_space<vmem>>, %arg3: memref<32x32xf32, #tpu.memory_space<vmem>>, %arg4: memref<1x32xf32, #tpu.memory_space<vmem>>, %arg5: memref<2x32xf32, #tpu.memory_space<vmem>>, %arg6: memref<2x128xf32, #tpu.memory_space<vmem>>) attributes {dimension_semantics = [#tpu.dimension_semantics<parallel>, #tpu.dimension_semantics<arbitrary>], iteration_bounds = array<i64: 1, 1>, scalar_prefetch = 0 : i64, scratch_operands = 1 : i64, tpu.core_type = #tpu.core_type<tc>, window_params = [{transform_indices = @transform_0, window_bounds = array<i64: 2, 2, 128>}, {pipeline_mode = #tpu.pipeline_mode<synchronous>, transform_indices = @transform_1, window_bounds = array<i64: 32, 32>}, {pipeline_mode = #tpu.pipeline_mode<synchronous>, transform_indices = @transform_2, window_bounds = array<i64: 1, 32>}, {transform_indices = @transform_3, window_bounds = array<i64: 2, 32>}]} {
    %c0_i32 = arith.constant 0 : i32
    %0 = arith.cmpi eq, %arg1, %c0_i32 : i32
    %1 = arith.extui %0 : i1 to i32
    %c0_i32_0 = arith.constant 0 : i32
    %2 = arith.cmpi ne, %1, %c0_i32_0 : i32
    scf.if %2 {
      %cst_9 = arith.constant 0.000000e+00 : f32
      %11 = vector.broadcast %cst_9 : f32 to vector<2x128xf32>
      %c0_10 = arith.constant 0 : index
      %c0_11 = arith.constant 0 : index
      %12 = vector.load %arg6[%c0_10, %c0_11] : memref<2x128xf32, #tpu.memory_space<vmem>>, vector<2x128xf32>
      tpu.vector_store %arg6[%c0_10, %c0_11], %11 {strides = array<i32>} : memref<2x128xf32, #tpu.memory_space<vmem>>, vector<2x128xf32>,
    } else {
    }
    %c0 = arith.constant 0 : index
    %c0_1 = arith.constant 0 : index
    %c0_2 = arith.constant 0 : index
    %3 = vector.load %arg2[%c0, %c0_1, %c0_2] : memref<2x2x128xf32, #tpu.memory_space<vmem>>, vector<2x2x128xf32>
    %c0_3 = arith.constant 0 : index
    %c0_4 = arith.constant 0 : index
    %4 = vector.load %arg6[%c0_3, %c0_4] : memref<2x128xf32, #tpu.memory_space<vmem>>, vector<2x128xf32>
    %cst = arith.constant dense<0.000000e+00> : vector<2x128xf32>
    %5 = vector.multi_reduction <add>, %3, %cst [1] : vector<2x2x128xf32> to vector<2x128xf32>
    %6 = arith.addf %4, %5 : vector<2x128xf32>
    %c0_5 = arith.constant 0 : index
    %c0_6 = arith.constant 0 : index
    %7 = vector.load %arg6[%c0_5, %c0_6] : memref<2x128xf32, #tpu.memory_space<vmem>>, vector<2x128xf32>
    tpu.vector_store %arg6[%c0_5, %c0_6], %6 {strides = array<i32>} : memref<2x128xf32, #tpu.memory_space<vmem>>, vector<2x128xf32>,
    %c0_i32_7 = arith.constant 0 : i32
    %8 = arith.cmpi eq, %arg1, %c0_i32_7 : i32
    %9 = arith.extui %8 : i1 to i32
    %c0_i32_8 = arith.constant 0 : i32
    %10 = arith.cmpi ne, %9, %c0_i32_8 : i32
    scf.if %10 {
      %c0_9 = arith.constant 0 : index
      %c0_10 = arith.constant 0 : index
      %11 = vector.load %arg6[%c0_9, %c0_10] : memref<2x128xf32, #tpu.memory_space<vmem>>, vector<2x128xf32>
      %12 = vector.extract_strided_slice %11 {offsets = [0, 0], sizes = [2, 32], strides = [1, 1]} : vector<2x128xf32> to vector<2x32xf32>
      %13 = vector.extract_strided_slice %11 {offsets = [0, 32], sizes = [2, 32], strides = [1, 1]} : vector<2x128xf32> to vector<2x32xf32>
      %14 = arith.addf %12, %13 : vector<2x32xf32>
      %15 = vector.extract_strided_slice %11 {offsets = [0, 64], sizes = [2, 32], strides = [1, 1]} : vector<2x128xf32> to vector<2x32xf32>
      %16 = arith.addf %14, %15 : vector<2x32xf32>
      %17 = vector.extract_strided_slice %11 {offsets = [0, 96], sizes = [2, 32], strides = [1, 1]} : vector<2x128xf32> to vector<2x32xf32>
      %18 = arith.addf %16, %17 : vector<2x32xf32>
      %cst_11 = arith.constant 1.250000e-01 : f32
      %19 = vector.broadcast %cst_11 : f32 to vector<2x32xf32>
      %20 = arith.mulf %18, %19 : vector<2x32xf32>
      %c0_12 = arith.constant 0 : index
      %c0_13 = arith.constant 0 : index
      %21 = vector.load %arg3[%c0_12, %c0_13] : memref<32x32xf32, #tpu.memory_space<vmem>>, vector<32x32xf32>
      %cst_14 = arith.constant dense<0.000000e+00> : vector<2x32xf32>
      %22 = tpu.matmul %20, %21, %cst_14 {dimension_numbers = #tpu.dot_dimension_numbers<[1], [0], [0], [1], [0, 0, 1, 1], [], []>} : vector<2x32xf32>, vector<32x32xf32>, vector<2x32xf32> -> vector<2x32xf32>
      %c0_15 = arith.constant 0 : index
      %c0_16 = arith.constant 0 : index
      %23 = vector.load %arg4[%c0_15, %c0_16] : memref<1x32xf32, #tpu.memory_space<vmem>>, vector<1x32xf32>
      %24 = vector.broadcast %23 : vector<1x32xf32> to vector<2x32xf32>
      %25 = arith.addf %22, %24 : vector<2x32xf32>
      %c0_17 = arith.constant 0 : index
      %c0_18 = arith.constant 0 : index
      %26 = vector.load %arg5[%c0_17, %c0_18] : memref<2x32xf32, #tpu.memory_space<vmem>>, vector<2x32xf32>
      tpu.vector_store %arg5[%c0_17, %c0_18], %25 {strides = array<i32>} : memref<2x32xf32, #tpu.memory_space<vmem>>, vector<2x32xf32>,
    } else {
    }
    return
  }
  func.func @transform_0(%arg0: i32, %arg1: i32) -> (i32, i32, i32) {
    %c0_i32 = arith.constant 0 : i32
    %c0_i32_0 = arith.constant 0 : i32
    return %arg0, %arg1, %c0_i32 : i32, i32, i32
  }
  func.func @transform_1(%arg0: i32, %arg1: i32) -> (i32, i32) {
    %c0_i32 = arith.constant 0 : i32
    %c0_i32_0 = arith.constant 0 : i32
    %c0_i32_1 = arith.constant 0 : i32
    return %c0_i32, %c0_i32_0 : i32, i32
  }
  func.func @transform_2(%arg0: i32, %arg1: i32) -> (i32, i32) {
    %c0_i32 = arith.constant 0 : i32
    %c0_i32_0 = arith.constant 0 : i32
    %c0_i32_1 = arith.constant 0 : i32
    return %c0_i32, %c0_i32_0 : i32, i32
  }
  func.func @transform_3(%arg0: i32, %arg1: i32) -> (i32, i32) {
    %c0_i32 = arith.constant 0 : i32
    %c0_i32_0 = arith.constant 0 : i32
    return %arg0, %c0_i32 : i32, i32
  }
}

</mosaic_0001>

<llo_original>
// kernel: tpu_custom_call.1
$region0: #{tpu_custom_call.1}
  #allocation0 [shape = 'u32[]', space=smem, size = 0x4, offset = 0x4, fixed_abs, tag = 'smem constant byte address 0x4 - core index']
  #allocation1 [shape = 'u32[144,128]{1,0:T(1,128)}', space=vmem, size = 0x12000, scoped, tag = 'internal scratch']
  #allocation2 [shape = 'f32[2,128]{1,0:T(2,128)}', space=vmem, size = 0x400, scoped, tag = 'scratch operand']
  %s0 = inlined_call_operand.hbm [shape: f32[2,2,128], index: 0, kind: input, shape index: {}]
  %s1 = inlined_call_operand.hbm [shape: f32[32,32], index: 1, kind: input, shape index: {}]
  %s2 = inlined_call_operand.vmem [shape: f32[1,32], index: 2, kind: input, shape index: {}]
  %s3 = inlined_call_operand.hbm [shape: f32[2,32], index: 3, kind: output, shape index: {}]
  %s4 = sld [smem:[#allocation0]]
  $region38: #{tpu_custom_call.1} parent=0
    _
  %s6 = ssub.s32 1, %s4
  %s7 = scalar_select 0, %s6, %s4
  $region1: #{tpu_custom_call.1} parent=0
    #allocation3 [shape = 'u8[2048]{0}', space=vmem, size = 0x800, scoped, tag = 'input window, operand 0, single buffered']
    #allocation4 [shape = 's32[1]{0}', space=sflag, size = 0x4, scoped, tag = 'scoped memory for tpu_custom_call.1']
    #allocation5 [shape = 's32[1]{0}', space=sflag, size = 0x4, scoped, tag = 'scoped memory for tpu_custom_call.1']
    #allocation6 [shape = 'u8[16384]{0}', space=vmem, size = 0x4000, scoped, tag = 'input window, operand 1, single buffered']
    #allocation7 [shape = 's32[1]{0}', space=sflag, size = 0x4, scoped, tag = 'scoped memory for tpu_custom_call.1']
    #allocation8 [shape = 'u8[1024]{0}', space=vmem, size = 0x400, scoped, tag = 'output window, operand 0, single buffered']
    %8 = vsyncpa [#allocation4], 0
    %9 = vsyncpa [#allocation7], 0
    %10 = vsyncpa [#allocation5], 0
    // Predicated region
    $region2: #{tpu_custom_call.1} parent=1 // pred_check
      _
    $region3: #{tpu_custom_call.1} parent=1 // pred_check_branch
      %12 = sbr.rel (0) target = $region5
    $region4: #{tpu_custom_call.1} parent=1 // pred_region
      %s14 = ssub.s32 64, 64
      %15 = vsyncadd [#allocation4], %s14
      %s16 = sshll.u32 [#allocation3], 4
      %s17 = int_to_ptr.vmem [resolvable:$true] %s16
      %22 = dma.hbm_to_vmem [thread:$0]  %s0, 64, %s17, [#allocation4], 32, 32, 2
    $region5: #{tpu_custom_call.1} parent=1 // pred_fallthru
      _
    // Predicated region
    $region6: #{tpu_custom_call.1} parent=1 // pred_check
      _
    $region7: #{tpu_custom_call.1} parent=1 // pred_check_branch
      %24 = sbr.rel (0) target = $region9
    $region8: #{tpu_custom_call.1} parent=1 // pred_region
      %s26 = ssub.s32 512, 512
      %27 = vsyncadd [#allocation7], %s26
      %s28 = sshll.u32 [#allocation6], 4
      %s29 = int_to_ptr.vmem [resolvable:$true] %s28
      %34 = dma.hbm_to_vmem [thread:$0]  %s1, 512, %s29, [#allocation7], 128, 128, 8
    $region9: #{tpu_custom_call.1} parent=1 // pred_fallthru
      _
    // Predicated region
    $region10: #{tpu_custom_call.1} parent=1 // pred_check
      _
    $region11: #{tpu_custom_call.1} parent=1 // pred_check_branch
      %36 = sbr.rel (0) target = $region13
    $region12: #{tpu_custom_call.1} parent=1 // pred_region
      _
    $region13: #{tpu_custom_call.1} parent=1 // pred_fallthru
      _
    // Predicated region
    $region14: #{tpu_custom_call.1} parent=1 // pred_check
      _
    $region15: #{tpu_custom_call.1} parent=1 // pred_check_branch
      %38 = sbr.rel (0) target = $region17
    $region16: #{tpu_custom_call.1} parent=1 // pred_region
      %39 = dma.done [#allocation4], 64
    $region17: #{tpu_custom_call.1} parent=1 // pred_fallthru
      _
    // Predicated region
    $region18: #{tpu_custom_call.1} parent=1 // pred_check
      _
    $region19: #{tpu_custom_call.1} parent=1 // pred_check_branch
      %41 = sbr.rel (0) target = $region21
    $region20: #{tpu_custom_call.1} parent=1 // pred_region
      %42 = dma.done [#allocation7], 512
    $region21: #{tpu_custom_call.1} parent=1 // pred_fallthru
      _
    %p43 = scmp.eq.s32.totalorder 0, 0
    // Predicated region
    $region22: #{tpu_custom_call.1} parent=1 // pred_check
      %p44 = pneg %p43
    $region23: #{tpu_custom_call.1} parent=1 // pred_check_branch
      %46 = sbr.rel (%p44) target = $region25
    $region24: #{tpu_custom_call.1} parent=1 // pred_region
      %47 = vst [vmem:[#allocation2] sm:$0x3] 0.0
    $region25: #{tpu_custom_call.1} parent=1 // pred_fallthru
      _
    %v48 = vld [vmem:[#allocation3] sm:$0x3]
    %v49 = vld [vmem:[#allocation3 + $0x2] sm:$0x3]
    %v50 = vld [vmem:[#allocation2] sm:$0x3]
    %vm51 = vcmask 1041408
    %v52 = vsel %vm51, %v48, 0.0
    %v53 = vrot.slane %v52, 4
    %v54 = vadd.f32 %v52, %v53
    %v55 = vrot.slane %v54, 2
    %v56 = vadd.f32 %v54, %v55
    %v57 = vrot.slane %v56, 1
    %v58 = vadd.f32 %v56, %v57
    %v59 = vsel %vm51, %v49, 0.0
    %v60 = vrot.slane %v59, 4
    %v61 = vadd.f32 %v59, %v60
    %v62 = vrot.slane %v61, 2
    %v63 = vadd.f32 %v61, %v62
    %v64 = vrot.slane %v63, 1
    %v65 = vadd.f32 %v63, %v64
    %vm68 = vcmask 1041409
    %v69 = vsel %vm68, %v65, %v58
    %v71 = vadd.f32 %v50, %v69
    %72 = vst [vmem:[#allocation2] sm:$0x3] %v71
    // Predicated region
    $region26: #{tpu_custom_call.1} parent=1 // pred_check
      %p73 = pneg %p43
    $region27: #{tpu_custom_call.1} parent=1 // pred_check_branch
      %75 = sbr.rel (%p73) target = $region29
    $region28: #{tpu_custom_call.1} parent=1 // pred_region
      %v76 = vld [vmem:[#allocation2] sm:$0x3]
      %78 = vrot.lane.b32.xlu0 %v76, 96
      %v79 = vpop.permute.xlu0 %78
      %v81 = vadd.f32 %v76, %v79
      %82 = vrot.lane.b32.xlu0 %v76, 64
      %v83 = vpop.permute.xlu0 %82
      %v85 = vadd.f32 %v81, %v83
      %86 = vrot.lane.b32.xlu0 %v76, 32
      %v87 = vpop.permute.xlu0 %86
      %v89 = vadd.f32 %v85, %v87
      %v90 = vmul.f32 %v89, 0.125
      %v91 = vld [vmem:[#allocation6] sm:$0xff]
      %v92 = vld [vmem:[#allocation6 + $0x8] sm:$0xff]
      %v93 = vld [vmem:[#allocation6 + $0x10] sm:$0xff]
      %v94 = vld [vmem:[#allocation6 + $0x18] sm:$0xff]
      %v95 = vld [vmem:[%s2] sm:$0x1]
      %v97 = vlaneseq
      %v98 = vshrl.u32 %v97, 7
      %v99 = vsub.s32 0, %v98
      %v100 = vrot.slane %v95, %v99
      %vm102 = vcmask 261120
      %v104 = vsel %vm102, %v90, 0
      %106 = vmatprep.subr.mxu0 0.0
      %107 = vmatpush1.msra.mxu0 0.0
      %108 = vmatprep.subr.mxu0 0.0
      %109 = vmatpush1.msra.mxu0 0.0
      %110 = vmatprep.subr.mxu0 0.0
      %111 = vmatpush1.msra.mxu0 0.0
      %112 = vmatprep.subr.mxu0 0.0
      %113 = vmatpush1.msra.mxu0 0.0
      %114 = vmatprep.subr.mxu0 0.0
      %115 = vmatpush1.msra.mxu0 0.0
      %116 = vmatprep.subr.mxu0 0.0
      %117 = vmatpush1.msra.mxu0 0.0
      %118 = vmatprep.subr.mxu0 0.0
      %119 = vmatpush1.msra.mxu0 0.0
      %120 = vmatprep.subr.mxu0 0.0
      %121 = vmatpush1.msra.mxu0 0.0
      %122 = vmatprep.subr.mxu0 0.0
      %123 = vmatpush1.msra.mxu0 0.0
      %124 = vmatprep.subr.mxu0 0.0
      %125 = vmatpush1.msra.mxu0 0.0
      %126 = vmatprep.subr.mxu0 0.0
      %127 = vmatpush1.msra.mxu0 0.0
      %128 = vmatprep.subr.mxu0 0.0
      %129 = vmatpush1.msra.mxu0 0.0
      %130 = vmatprep.subr.mxu0 0.0
      %131 = vmatpush1.msra.mxu0 %v94
      %132 = vmatprep.subr.mxu0 0.0
      %133 = vmatpush1.msra.mxu0 %v93
      %134 = vmatprep.subr.mxu0 0.0
      %135 = vmatpush1.msra.mxu0 %v92
      %136 = vmatprep.subr.mxu0 0.0
      %137 = vmatpush1.msra.mxu0 %v91
      %138 = vmatprep.subr.mxu0 0.0
      %139 = vmatpush2.msra.mxu0 0.0
      %140 = vmatprep.subr.mxu0 0.0
      %141 = vmatpush2.msra.mxu0 0.0
      %142 = vmatprep.subr.mxu0 0.0
      %143 = vmatpush2.msra.mxu0 0.0
      %144 = vmatprep.subr.mxu0 0.0
      %145 = vmatpush2.msra.mxu0 0.0
      %146 = vmatprep.subr.mxu0 0.0
      %147 = vmatpush2.msra.mxu0 0.0
      %148 = vmatprep.subr.mxu0 0.0
      %149 = vmatpush2.msra.mxu0 0.0
      %150 = vmatprep.subr.mxu0 0.0
      %151 = vmatpush2.msra.mxu0 0.0
      %152 = vmatprep.subr.mxu0 0.0
      %153 = vmatpush2.msra.mxu0 0.0
      %154 = vmatprep.subr.mxu0 0.0
      %155 = vmatpush2.msra.mxu0 0.0
      %156 = vmatprep.subr.mxu0 0.0
      %157 = vmatpush2.msra.mxu0 0.0
      %158 = vmatprep.subr.mxu0 0.0
      %159 = vmatpush2.msra.mxu0 0.0
      %160 = vmatprep.subr.mxu0 0.0
      %161 = vmatpush2.msra.mxu0 0.0
      %162 = vmatprep.subr.mxu0 0.0
      %163 = vmatpush2.msra.mxu0 0.0
      %164 = vmatprep.subr.mxu0 0.0
      %165 = vmatpush2.msra.mxu0 0.0
      %166 = vmatprep.subr.mxu0 0.0
      %167 = vmatpush2.msra.mxu0 0.0
      %168 = vmatprep.subr.mxu0 0.0
      %169 = vmatpush2.msra.mxu0 0.0
      %170 = vmatprep.mubr.f32.mxu0 0.0
      %171 = vmatmul.mubr.f32.gmra.mxu0 %v104
      %v172 = vpop.f32.mrf.mxu0
      %v173 = vadd.f32 %v100, %v172
      %v174 = vpop.f32.mrf.mxu0
      %175 = vdwg.mxu0
      %vm176 = vcmask 254976
      %177 = vst.msk [vmem:[#allocation8] sm:$0x3] %vm176, %v173
    $region29: #{tpu_custom_call.1} parent=1 // pred_fallthru
      _
    // Predicated region
    $region30: #{tpu_custom_call.1} parent=1 // pred_check
      _
    $region31: #{tpu_custom_call.1} parent=1 // pred_check_branch
      %179 = sbr.rel (0) target = $region33
    $region32: #{tpu_custom_call.1} parent=1 // pred_region
      %s181 = ssub.s32 32, 32
      %182 = vsyncadd [#allocation5], %s181
      %s184 = sshll.u32 [#allocation8], 4
      %s185 = int_to_ptr.vmem [resolvable:$true] %s184
      %187 = dma.vmem_to_hbm [thread:$0]  %s185, 32, %s3, [#allocation5]
    $region33: #{tpu_custom_call.1} parent=1 // pred_fallthru
      _
    // Predicated region
    $region34: #{tpu_custom_call.1} parent=1 // pred_check
      _
    $region35: #{tpu_custom_call.1} parent=1 // pred_check_branch
      %189 = sbr.rel (0) target = $region37
    $region36: #{tpu_custom_call.1} parent=1 // pred_region
      %190 = dma.done [#allocation5], 32
    $region37: #{tpu_custom_call.1} parent=1 // pred_fallthru
      _
    %191 = vsyncpa [#allocation4], 1
    %192 = vsyncpa [#allocation7], 1
    %193 = vsyncpa [#allocation5], 1

// kernel: tpu_custom_call.1
$region0: #{tpu_custom_call.1}
  #allocation0 [shape = 'u32[]', space=smem, size = 0x4, offset = 0x4, fixed_abs, tag = 'smem constant byte address 0x4 - core index']
  #allocation1 [shape = 'u32[144,128]{1,0:T(1,128)}', space=vmem, size = 0x12000, scoped, tag = 'internal scratch']
  #allocation2 [shape = 'f32[2,128]{1,0:T(2,128)}', space=vmem, size = 0x400, scoped, tag = 'scratch operand']
  %s0 = inlined_call_operand.hbm [shape: f32[2,2,128], index: 0, kind: input, shape index: {}]
  %s1 = inlined_call_operand.hbm [shape: f32[32,32], index: 1, kind: input, shape index: {}]
  %s2 = inlined_call_operand.vmem [shape: f32[1,32], index: 2, kind: input, shape index: {}]
  %s3 = inlined_call_operand.hbm [shape: f32[2,32], index: 3, kind: output, shape index: {}]
  %s4 = sld [smem:[#allocation0]]
  $region38: #{tpu_custom_call.1} parent=0
    _
  %s6 = ssub.s32 1, %s4
  %s7 = scalar_select 0, %s6, %s4
  $region1: #{tpu_custom_call.1} parent=0
    #allocation3 [shape = 'u8[2048]{0}', space=vmem, size = 0x800, scoped, tag = 'input window, operand 0, single buffered']
    #allocation4 [shape = 's32[1]{0}', space=sflag, size = 0x4, scoped, tag = 'scoped memory for tpu_custom_call.1']
    #allocation5 [shape = 's32[1]{0}', space=sflag, size = 0x4, scoped, tag = 'scoped memory for tpu_custom_call.1']
    #allocation6 [shape = 'u8[16384]{0}', space=vmem, size = 0x4000, scoped, tag = 'input window, operand 1, single buffered']
    #allocation7 [shape = 's32[1]{0}', space=sflag, size = 0x4, scoped, tag = 'scoped memory for tpu_custom_call.1']
    #allocation8 [shape = 'u8[1024]{0}', space=vmem, size = 0x400, scoped, tag = 'output window, operand 0, single buffered']
    %8 = vsyncpa [#allocation4], 0
    %9 = vsyncpa [#allocation7], 0
    %10 = vsyncpa [#allocation5], 0
    // Predicated region
    $region2: #{tpu_custom_call.1} parent=1 // pred_check
      _
    $region3: #{tpu_custom_call.1} parent=1 // pred_check_branch
      %12 = sbr.rel (0) target = $region5
    $region4: #{tpu_custom_call.1} parent=1 // pred_region
      %s14 = ssub.s32 64, 64
      %15 = vsyncadd [#allocation4], %s14
      %s16 = sshll.u32 [#allocation3], 4
      %s17 = int_to_ptr.vmem [resolvable:$true] %s16
      %22 = dma.hbm_to_vmem [thread:$0]  %s0, 64, %s17, [#allocation4], 32, 32, 2
    $region5: #{tpu_custom_call.1} parent=1 // pred_fallthru
      _
    // Predicated region
    $region6: #{tpu_custom_call.1} parent=1 // pred_check
      _
    $region7: #{tpu_custom_call.1} parent=1 // pred_check_branch
      %24 = sbr.rel (0) target = $region9
    $region8: #{tpu_custom_call.1} parent=1 // pred_region
      %s26 = ssub.s32 512, 512
      %27 = vsyncadd [#allocation7], %s26
      %s28 = sshll.u32 [#allocation6], 4
      %s29 = int_to_ptr.vmem [resolvable:$true] %s28
      %34 = dma.hbm_to_vmem [thread:$0]  %s1, 512, %s29, [#allocation7], 128, 128, 8
    $region9: #{tpu_custom_call.1} parent=1 // pred_fallthru
      _
    // Predicated region
    $region10: #{tpu_custom_call.1} parent=1 // pred_check
      _
    $region11: #{tpu_custom_call.1} parent=1 // pred_check_branch
      %36 = sbr.rel (0) target = $region13
    $region12: #{tpu_custom_call.1} parent=1 // pred_region
      _
    $region13: #{tpu_custom_call.1} parent=1 // pred_fallthru
      _
    // Predicated region
    $region14: #{tpu_custom_call.1} parent=1 // pred_check
      _
    $region15: #{tpu_custom_call.1} parent=1 // pred_check_branch
      %38 = sbr.rel (0) target = $region17
    $region16: #{tpu_custom_call.1} parent=1 // pred_region
      %39 = dma.done [#allocation4], 64
    $region17: #{tpu_custom_call.1} parent=1 // pred_fallthru
      _
    // Predicated region
    $region18: #{tpu_custom_call.1} parent=1 // pred_check
      _
    $region19: #{tpu_custom_call.1} parent=1 // pred_check_branch
      %41 = sbr.rel (0) target = $region21
    $region20: #{tpu_custom_call.1} parent=1 // pred_region
      %42 = dma.done [#allocation7], 512
    $region21: #{tpu_custom_call.1} parent=1 // pred_fallthru
      _
    %p43 = scmp.eq.s32.totalorder 0, 0
    // Predicated region
    $region22: #{tpu_custom_call.1} parent=1 // pred_check
      %p44 = pneg %p43
    $region23: #{tpu_custom_call.1} parent=1 // pred_check_branch
      %46 = sbr.rel (%p44) target = $region25
    $region24: #{tpu_custom_call.1} parent=1 // pred_region
      %47 = vst [vmem:[#allocation2] sm:$0x3] 0.0
    $region25: #{tpu_custom_call.1} parent=1 // pred_fallthru
      _
    %v48 = vld [vmem:[#allocation3] sm:$0x3]
    %v49 = vld [vmem:[#allocation3 + $0x2] sm:$0x3]
    %v50 = vld [vmem:[#allocation2] sm:$0x3]
    %vm51 = vcmask 1041408
    %v52 = vsel %vm51, %v48, 0.0
    %v53 = vrot.slane %v52, 4
    %v54 = vadd.f32 %v52, %v53
    %v55 = vrot.slane %v54, 2
    %v56 = vadd.f32 %v54, %v55
    %v57 = vrot.slane %v56, 1
    %v58 = vadd.f32 %v56, %v57
    %v59 = vsel %vm51, %v49, 0.0
    %v60 = vrot.slane %v59, 4
    %v61 = vadd.f32 %v59, %v60
    %v62 = vrot.slane %v61, 2
    %v63 = vadd.f32 %v61, %v62
    %v64 = vrot.slane %v63, 1
    %v65 = vadd.f32 %v63, %v64
    %vm68 = vcmask 1041409
    %v69 = vsel %vm68, %v65, %v58
    %v71 = vadd.f32 %v50, %v69
    %72 = vst [vmem:[#allocation2] sm:$0x3] %v71
    // Predicated region
    $region26: #{tpu_custom_call.1} parent=1 // pred_check
      %p73 = pneg %p43
    $region27: #{tpu_custom_call.1} parent=1 // pred_check_branch
      %75 = sbr.rel (%p73) target = $region29
    $region28: #{tpu_custom_call.1} parent=1 // pred_region
      %v76 = vld [vmem:[#allocation2] sm:$0x3]
      %78 = vrot.lane.b32.xlu0 %v76, 96
      %v79 = vpop.permute.xlu0 %78
      %v81 = vadd.f32 %v76, %v79
      %82 = vrot.lane.b32.xlu0 %v76, 64
      %v83 = vpop.permute.xlu0 %82
      %v85 = vadd.f32 %v81, %v83
      %86 = vrot.lane.b32.xlu0 %v76, 32
      %v87 = vpop.permute.xlu0 %86
      %v89 = vadd.f32 %v85, %v87
      %v90 = vmul.f32 %v89, 0.125
      %v91 = vld [vmem:[#allocation6] sm:$0xff]
      %v92 = vld [vmem:[#allocation6 + $0x8] sm:$0xff]
      %v93 = vld [vmem:[#allocation6 + $0x10] sm:$0xff]
      %v94 = vld [vmem:[#allocation6 + $0x18] sm:$0xff]
      %v95 = vld [vmem:[%s2] sm:$0x1]
      %v97 = vlaneseq
      %v98 = vshrl.u32 %v97, 7
      %v99 = vsub.s32 0, %v98
      %v100 = vrot.slane %v95, %v99
      %vm102 = vcmask 261120
      %v104 = vsel %vm102, %v90, 0
      %106 = vmatprep.subr.mxu0 0.0
      %107 = vmatpush1.msra.mxu0 0.0
      %108 = vmatprep.subr.mxu0 0.0
      %109 = vmatpush1.msra.mxu0 0.0
      %110 = vmatprep.subr.mxu0 0.0
      %111 = vmatpush1.msra.mxu0 0.0
      %112 = vmatprep.subr.mxu0 0.0
      %113 = vmatpush1.msra.mxu0 0.0
      %114 = vmatprep.subr.mxu0 0.0
      %115 = vmatpush1.msra.mxu0 0.0
      %116 = vmatprep.subr.mxu0 0.0
      %117 = vmatpush1.msra.mxu0 0.0
      %118 = vmatprep.subr.mxu0 0.0
      %119 = vmatpush1.msra.mxu0 0.0
      %120 = vmatprep.subr.mxu0 0.0
      %121 = vmatpush1.msra.mxu0 0.0
      %122 = vmatprep.subr.mxu0 0.0
      %123 = vmatpush1.msra.mxu0 0.0
      %124 = vmatprep.subr.mxu0 0.0
      %125 = vmatpush1.msra.mxu0 0.0
      %126 = vmatprep.subr.mxu0 0.0
      %127 = vmatpush1.msra.mxu0 0.0
      %128 = vmatprep.subr.mxu0 0.0
      %129 = vmatpush1.msra.mxu0 0.0
      %130 = vmatprep.subr.mxu0 0.0
      %131 = vmatpush1.msra.mxu0 %v94
      %132 = vmatprep.subr.mxu0 0.0
      %133 = vmatpush1.msra.mxu0 %v93
      %134 = vmatprep.subr.mxu0 0.0
      %135 = vmatpush1.msra.mxu0 %v92
      %136 = vmatprep.subr.mxu0 0.0
      %137 = vmatpush1.msra.mxu0 %v91
      %138 = vmatprep.subr.mxu0 0.0
      %139 = vmatpush2.msra.mxu0 0.0
      %140 = vmatprep.subr.mxu0 0.0
      %141 = vmatpush2.msra.mxu0 0.0
      %142 = vmatprep.subr.mxu0 0.0
      %143 = vmatpush2.msra.mxu0 0.0
      %144 = vmatprep.subr.mxu0 0.0
      %145 = vmatpush2.msra.mxu0 0.0
      %146 = vmatprep.subr.mxu0 0.0
      %147 = vmatpush2.msra.mxu0 0.0
      %148 = vmatprep.subr.mxu0 0.0
      %149 = vmatpush2.msra.mxu0 0.0
      %150 = vmatprep.subr.mxu0 0.0
      %151 = vmatpush2.msra.mxu0 0.0
      %152 = vmatprep.subr.mxu0 0.0
      %153 = vmatpush2.msra.mxu0 0.0
      %154 = vmatprep.subr.mxu0 0.0
      %155 = vmatpush2.msra.mxu0 0.0
      %156 = vmatprep.subr.mxu0 0.0
      %157 = vmatpush2.msra.mxu0 0.0
      %158 = vmatprep.subr.mxu0 0.0
      %159 = vmatpush2.msra.mxu0 0.0
      %160 = vmatprep.subr.mxu0 0.0
      %161 = vmatpush2.msra.mxu0 0.0
      %162 = vmatprep.subr.mxu0 0.0
      %163 = vmatpush2.msra.mxu0 0.0
      %164 = vmatprep.subr.mxu0 0.0
      %165 = vmatpush2.msra.mxu0 0.0
      %166 = vmatprep.subr.mxu0 0.0
      %167 = vmatpush2.msra.mxu0 0.0
      %168 = vmatprep.subr.mxu0 0.0
      %169 = vmatpush2.msra.mxu0 0.0
      %170 = vmatprep.mubr.f32.mxu0 0.0
      %171 = vmatmul.mubr.f32.gmra.mxu0 %v104
      %v172 = vpop.f32.mrf.mxu0
      %v173 = vadd.f32 %v100, %v172
      %v174 = vpop.f32.mrf.mxu0
      %175 = vdwg.mxu0
      %vm176 = vcmask 254976
      %177 = vst.msk [vmem:[#allocation8] sm:$0x3] %vm176, %v173
    $region29: #{tpu_custom_call.1} parent=1 // pred_fallthru
      _
    // Predicated region
    $region30: #{tpu_custom_call.1} parent=1 // pred_check
      _
    $region31: #{tpu_custom_call.1} parent=1 // pred_check_branch
      %179 = sbr.rel (0) target = $region33
    $region32: #{tpu_custom_call.1} parent=1 // pred_region
      %s181 = ssub.s32 32, 32
      %182 = vsyncadd [#allocation5], %s181
      %s184 = sshll.u32 [#allocation8], 4
      %s185 = int_to_ptr.vmem [resolvable:$true] %s184
      %187 = dma.vmem_to_hbm [thread:$0]  %s185, 32, %s3, [#allocation5]
    $region33: #{tpu_custom_call.1} parent=1 // pred_fallthru
      _
    // Predicated region
    $region34: #{tpu_custom_call.1} parent=1 // pred_check
      _
    $region35: #{tpu_custom_call.1} parent=1 // pred_check_branch
      %189 = sbr.rel (0) target = $region37
    $region36: #{tpu_custom_call.1} parent=1 // pred_region
      %190 = dma.done [#allocation5], 32
    $region37: #{tpu_custom_call.1} parent=1 // pred_fallthru
      _
    %191 = vsyncpa [#allocation4], 1
    %192 = vsyncpa [#allocation7], 1
    %193 = vsyncpa [#allocation5], 1

</llo_original>
